<compile_context>
chip_gen: v6e
topology: v6e:2x2x1
jax: 0.10.0
libtpu: 0.0.40
codegen_flags: <defaults>
</compile_context>

<pallas_src>
import functools
import math

import jax
import jax.numpy as jnp
from jax import lax
from jax.experimental import pallas as pl
from jax.experimental.pallas import tpu as pltpu


def _round_up(x, m):
    return ((x + m - 1) // m) * m


def _patch_embed_kernel(x_ref, w_ref, b_ref, o_ref):
    # x_ref: (TM, K)  patch vectors (bf16)
    # w_ref: (K, TN)  projection block (bf16, resident across the row axis)
    # b_ref: (1, TN)  bias (f32)
    # o_ref: (TM, TN) output block
    acc = jnp.dot(x_ref[...], w_ref[...], preferred_element_type=jnp.float32)
    o_ref[...] = (acc + b_ref[...]).astype(o_ref.dtype)


@functools.partial(
    jax.jit,
    static_argnames=("patch_size", "block_rows", "block_cols", "compute_dtype",
                     "allow_input_fusion"),
)
def patch_embedding(x, weight, bias, patch_size, *,
                    block_rows=512, block_cols=1024,
                    compute_dtype=jnp.bfloat16, allow_input_fusion=True):
    """x: (B, C, H, W) NCHW.  weight: (E, C, P, P) Conv2d OIHW.  bias: (E,).
    Returns (B, n_patches, E), matching the PyTorch module's forward."""
    B, C, H, W = x.shape
    E = weight.shape[0]
    P = patch_size
    assert H % P == 0 and W % P == 0, "image size must be divisible by patch"
    Hp, Wp = H // P, W // P
    n_patches = Hp * Wp
    K = C * P * P
    M = B * n_patches

    cd = jnp.dtype(compute_dtype) if compute_dtype is not None else x.dtype

    # --- glue: patch extraction, (C, kh, kw) flatten order ---------------------
    xc = x.astype(cd)
    patches = xc.reshape(B, C, Hp, P, Wp, P)
    patches = jnp.transpose(patches, (0, 2, 4, 1, 3, 5)).reshape(M, K)

    # Conv2d weight (E, C, P, P) -> (K, E); done once per call (tiny), then kept
    # resident in VMEM across the whole row grid (constant index_map below).
    w_mat = weight.reshape(E, K).T.astype(cd)
    b_mat = bias.reshape(1, E).astype(jnp.float32)

    # --- tiling -----------------------------------------------------------------
    # TM: multiple of 8 sublanes; default 512 fills the 256-wide v6e/v7x MXU
    #     (and 4x128 on v5e).  Clamped for tiny problems.
    # TN: lane axis; full E if it fits, otherwise a multiple of 128.
    TM = min(block_rows, _round_up(M, 8))
    TN = E if E <= block_cols else block_cols
    grid = (pl.cdiv(M, TM), pl.cdiv(E, TN))

    compiler_kwargs = dict(dimension_semantics=("parallel", "parallel"))
    if allow_input_fusion:
        # Allow XLA to fuse the patch-extraction reshape/transpose into the
        # kernel's first input instead of materializing (M, K) in HBM.
        compiler_kwargs["allow_input_fusion"] = [True, False, False]

    out_flat = pl.pallas_call(
        _patch_embed_kernel,
        out_shape=jax.ShapeDtypeStruct((M, E), x.dtype),
        grid_spec=pltpu.PrefetchScalarGridSpec(
            num_scalar_prefetch=0,
            grid=grid,
            in_specs=[
                pl.BlockSpec((TM, K), lambda i, j: (i, 0)),   # patch rows
                pl.BlockSpec((K, TN), lambda i, j: (0, j)),   # weight block
                pl.BlockSpec((1, TN), lambda i, j: (0, j)),   # bias block
            ],
            out_specs=pl.BlockSpec((TM, TN), lambda i, j: (i, j)),
        ),
        compiler_params=pltpu.CompilerParams(**compiler_kwargs),
    )(patches, w_mat, b_mat)

    return out_flat.reshape(B, n_patches, E)


def _reference_conv(x, weight, bias, patch_size, dtype=None):
    """Pure-JAX reference: NCHW conv with stride == kernel, flatten, mT."""
    xr = x if dtype is None else x.astype(dtype)
    wr = weight if dtype is None else weight.astype(dtype)
    y = lax.conv_general_dilated(
        xr, wr,
        window_strides=(patch_size, patch_size),
        padding="VALID",
        dimension_numbers=("NCHW", "OIHW", "NCHW"),
        preferred_element_type=jnp.float32,
    )
    y = y + bias.reshape(1, -1, 1, 1).astype(jnp.float32)
    B, E, Hp, Wp = y.shape
    y = y.reshape(B, E, Hp * Wp)           # flatten(start_dim=2)
    return jnp.transpose(y, (0, 2, 1))     # .mT


if __name__ == "__main__":
    key = jax.random.PRNGKey(0)

    def run(x, w, b, P, **kw):
        try:
            return jax.block_until_ready(patch_embedding(x, w, b, patch_size=P, **kw))
        except Exception:
            # allow_input_fusion is a pure optimization hint; retry without it
            # if this XLA/Mosaic build rejects the parameter.
            kw = dict(kw, allow_input_fusion=False)
            return jax.block_until_ready(patch_embedding(x, w, b, patch_size=P, **kw))

    # --- case 1: small ViT-style shapes -------------------------------------
    B, C, H, W, P, E = 2, 3, 32, 32, 16, 128
    k1, k2, k3, key = jax.random.split(key, 4)
    x = jax.random.normal(k1, (B, C, H, W), dtype=jnp.float32)
    fan_in = C * P * P
    bound = 1.0 / math.sqrt(fan_in)
    weight = jax.random.uniform(k2, (E, C, P, P), jnp.float32, -bound, bound)
    bias = jax.random.uniform(k3, (E,), jnp.float32, -bound, bound)

    out = run(x, weight, bias, P)
    assert out.shape == (B, (H // P) * (W // P), E)
    # Tight check against a reference using the same bf16 operand quantization.
    ref_bf16 = _reference_conv(x, weight, bias, P, dtype=jnp.bfloat16)
    assert jnp.allclose(out, ref_bf16, atol=2e-3, rtol=2e-3)
    # Loose check against the full-f32 PyTorch-equivalent conv (bf16 roundoff).
    ref_f32 = _reference_conv(x, weight, bias, P)
    assert jnp.allclose(out, ref_f32, atol=3e-2, rtol=3e-2)

    # --- case 2: non-divisible row count exercises the cdiv / masked path ----
    B2, C2, H2, W2, P2, E2 = 2, 3, 48, 48, 16, 256   # M = 18 rows
    k1, k2, k3, key = jax.random.split(key, 4)
    x2 = jax.random.normal(k1, (B2, C2, H2, W2), dtype=jnp.float32)
    fan_in2 = C2 * P2 * P2
    bound2 = 1.0 / math.sqrt(fan_in2)
    w2 = jax.random.uniform(k2, (E2, C2, P2, P2), jnp.float32, -bound2, bound2)
    b2 = jax.random.uniform(k3, (E2,), jnp.float32, -bound2, bound2)

    # block_rows=16 -> grid (2, 2) with a partial (masked) final row block.
    out2 = run(x2, w2, b2, P2, block_rows=16, block_cols=128)
    assert out2.shape == (B2, (H2 // P2) * (W2 // P2), E2)
    ref2 = _reference_conv(x2, w2, b2, P2, dtype=jnp.bfloat16)
    assert jnp.allclose(out2, ref2, atol=2e-3, rtol=2e-3)

    print("KERNEL_OK")
</pallas_src>

<mosaic_0001>
module attributes {stable_mosaic.version = 11 : i64} {
  func.func @_patch_embed_kernel(%arg0: i32, %arg1: i32, %arg2: memref<8x768xbf16, #tpu.memory_space<vmem>>, %arg3: memref<768x128xbf16, #tpu.memory_space<vmem>>, %arg4: memref<1x128xf32, #tpu.memory_space<vmem>>, %arg5: memref<8x128xf32, #tpu.memory_space<vmem>>) attributes {dimension_semantics = [#tpu.dimension_semantics<parallel>, #tpu.dimension_semantics<parallel>], iteration_bounds = array<i64: 1, 1>, scalar_prefetch = 0 : i64, scratch_operands = 0 : i64, tpu.core_type = #tpu.core_type<tc>, window_params = [{transform_indices = @transform_0, window_bounds = array<i64: 8, 768>}, {transform_indices = @transform_1, window_bounds = array<i64: 768, 128>}, {transform_indices = @transform_2, window_bounds = array<i64: 1, 128>}, {transform_indices = @transform_3, window_bounds = array<i64: 8, 128>}]} {
    %c0 = arith.constant 0 : index
    %c0_0 = arith.constant 0 : index
    %0 = vector.load %arg2[%c0, %c0_0] : memref<8x768xbf16, #tpu.memory_space<vmem>>, vector<8x768xbf16>
    %c0_1 = arith.constant 0 : index
    %c0_2 = arith.constant 0 : index
    %1 = vector.load %arg3[%c0_1, %c0_2] : memref<768x128xbf16, #tpu.memory_space<vmem>>, vector<768x128xbf16>
    %cst = arith.constant dense<0.000000e+00> : vector<8x128xf32>
    %2 = tpu.matmul %0, %1, %cst {dimension_numbers = #tpu.dot_dimension_numbers<[1], [0], [0], [1], [0, 0, 1, 1], [], []>} : vector<8x768xbf16>, vector<768x128xbf16>, vector<8x128xf32> -> vector<8x128xf32>
    %c0_3 = arith.constant 0 : index
    %c0_4 = arith.constant 0 : index
    %3 = vector.load %arg4[%c0_3, %c0_4] : memref<1x128xf32, #tpu.memory_space<vmem>>, vector<1x128xf32>
    %4 = vector.broadcast %3 : vector<1x128xf32> to vector<8x128xf32>
    %5 = arith.addf %2, %4 : vector<8x128xf32>
    %c0_5 = arith.constant 0 : index
    %c0_6 = arith.constant 0 : index
    %6 = vector.load %arg5[%c0_5, %c0_6] : memref<8x128xf32, #tpu.memory_space<vmem>>, vector<8x128xf32>
    tpu.vector_store %arg5[%c0_5, %c0_6], %5 {strides = array<i32>} : memref<8x128xf32, #tpu.memory_space<vmem>>, vector<8x128xf32>,
    return
  }
  func.func @transform_0(%arg0: i32, %arg1: i32) -> (i32, i32) {
    %c0_i32 = arith.constant 0 : i32
    %c0_i32_0 = arith.constant 0 : i32
    return %arg0, %c0_i32 : i32, i32
  }
  func.func @transform_1(%arg0: i32, %arg1: i32) -> (i32, i32) {
    %c0_i32 = arith.constant 0 : i32
    %c0_i32_0 = arith.constant 0 : i32
    return %c0_i32, %arg1 : i32, i32
  }
  func.func @transform_2(%arg0: i32, %arg1: i32) -> (i32, i32) {
    %c0_i32 = arith.constant 0 : i32
    %c0_i32_0 = arith.constant 0 : i32
    return %c0_i32, %arg1 : i32, i32
  }
  func.func @transform_3(%arg0: i32, %arg1: i32) -> (i32, i32) {
    %c0_i32 = arith.constant 0 : i32
    return %arg0, %arg1 : i32, i32
  }
}

module attributes {stable_mosaic.version = 11 : i64} {
  func.func @_patch_embed_kernel(%arg0: i32, %arg1: i32, %arg2: memref<8x768xbf16, #tpu.memory_space<vmem>>, %arg3: memref<768x128xbf16, #tpu.memory_space<vmem>>, %arg4: memref<1x128xf32, #tpu.memory_space<vmem>>, %arg5: memref<8x128xf32, #tpu.memory_space<vmem>>) attributes {dimension_semantics = [#tpu.dimension_semantics<parallel>, #tpu.dimension_semantics<parallel>], iteration_bounds = array<i64: 1, 1>, scalar_prefetch = 0 : i64, scratch_operands = 0 : i64, tpu.core_type = #tpu.core_type<tc>, window_params = [{transform_indices = @transform_0, window_bounds = array<i64: 8, 768>}, {transform_indices = @transform_1, window_bounds = array<i64: 768, 128>}, {transform_indices = @transform_2, window_bounds = array<i64: 1, 128>}, {transform_indices = @transform_3, window_bounds = array<i64: 8, 128>}]} {
    %c0 = arith.constant 0 : index
    %c0_0 = arith.constant 0 : index
    %0 = vector.load %arg2[%c0, %c0_0] : memref<8x768xbf16, #tpu.memory_space<vmem>>, vector<8x768xbf16>
    %c0_1 = arith.constant 0 : index
    %c0_2 = arith.constant 0 : index
    %1 = vector.load %arg3[%c0_1, %c0_2] : memref<768x128xbf16, #tpu.memory_space<vmem>>, vector<768x128xbf16>
    %cst = arith.constant dense<0.000000e+00> : vector<8x128xf32>
    %2 = tpu.matmul %0, %1, %cst {dimension_numbers = #tpu.dot_dimension_numbers<[1], [0], [0], [1], [0, 0, 1, 1], [], []>} : vector<8x768xbf16>, vector<768x128xbf16>, vector<8x128xf32> -> vector<8x128xf32>
    %c0_3 = arith.constant 0 : index
    %c0_4 = arith.constant 0 : index
    %3 = vector.load %arg4[%c0_3, %c0_4] : memref<1x128xf32, #tpu.memory_space<vmem>>, vector<1x128xf32>
    %4 = vector.broadcast %3 : vector<1x128xf32> to vector<8x128xf32>
    %5 = arith.addf %2, %4 : vector<8x128xf32>
    %c0_5 = arith.constant 0 : index
    %c0_6 = arith.constant 0 : index
    %6 = vector.load %arg5[%c0_5, %c0_6] : memref<8x128xf32, #tpu.memory_space<vmem>>, vector<8x128xf32>
    tpu.vector_store %arg5[%c0_5, %c0_6], %5 {strides = array<i32>} : memref<8x128xf32, #tpu.memory_space<vmem>>, vector<8x128xf32>,
    return
  }
  func.func @transform_0(%arg0: i32, %arg1: i32) -> (i32, i32) {
    %c0_i32 = arith.constant 0 : i32
    %c0_i32_0 = arith.constant 0 : i32
    return %arg0, %c0_i32 : i32, i32
  }
  func.func @transform_1(%arg0: i32, %arg1: i32) -> (i32, i32) {
    %c0_i32 = arith.constant 0 : i32
    %c0_i32_0 = arith.constant 0 : i32
    return %c0_i32, %arg1 : i32, i32
  }
  func.func @transform_2(%arg0: i32, %arg1: i32) -> (i32, i32) {
    %c0_i32 = arith.constant 0 : i32
    %c0_i32_0 = arith.constant 0 : i32
    return %c0_i32, %arg1 : i32, i32
  }
  func.func @transform_3(%arg0: i32, %arg1: i32) -> (i32, i32) {
    %c0_i32 = arith.constant 0 : i32
    return %arg0, %arg1 : i32, i32
  }
}

</mosaic_0001>

<llo_original>
// kernel: patch_embedding.1
$region0: #{patch_embedding.1}
  #allocation0 [shape = 'u32[]', space=smem, size = 0x4, offset = 0x4, fixed_abs, tag = 'smem constant byte address 0x4 - core index']
  #allocation1 [shape = 'u32[144,128]{1,0:T(1,128)}', space=vmem, size = 0x12000, scoped, tag = 'internal scratch']
  %s0 = inlined_call_operand.vmem [shape: bf16[8,768], index: 0, kind: input, shape index: {}]
  %s1 = inlined_call_operand.vmem [shape: bf16[768,128], index: 1, kind: input, shape index: {}]
  %s2 = inlined_call_operand.vmem [shape: f32[1,128], index: 2, kind: input, shape index: {}]
  %s3 = inlined_call_operand.hbm [shape: f32[8,128], index: 3, kind: output, shape index: {}]
  %s4 = sld [smem:[#allocation0]]
  $region22: #{patch_embedding.1} parent=0
    _
  %s6 = ssub.s32 1, %s4
  %s7 = scalar_select 0, %s6, %s4
  $region1: #{patch_embedding.1} parent=0
    #allocation2 [shape = 'u8[4096]{0}', space=vmem, size = 0x1000, scoped, tag = 'output window, operand 0, single buffered']
    #allocation3 [shape = 's32[1]{0}', space=sflag, size = 0x4, scoped, tag = 'scoped memory for patch_embedding.1']
    %8 = vsyncpa [#allocation3], 0
    // Predicated region
    $region2: #{patch_embedding.1} parent=1 // pred_check
      _
    $region3: #{patch_embedding.1} parent=1 // pred_check_branch
      %10 = sbr.rel (0) target = $region5
    $region4: #{patch_embedding.1} parent=1 // pred_region
      _
    $region5: #{patch_embedding.1} parent=1 // pred_fallthru
      _
    // Predicated region
    $region6: #{patch_embedding.1} parent=1 // pred_check
      _
    $region7: #{patch_embedding.1} parent=1 // pred_check_branch
      %12 = sbr.rel (0) target = $region9
    $region8: #{patch_embedding.1} parent=1 // pred_region
      _
    $region9: #{patch_embedding.1} parent=1 // pred_fallthru
      _
    // Predicated region
    $region10: #{patch_embedding.1} parent=1 // pred_check
      _
    $region11: #{patch_embedding.1} parent=1 // pred_check_branch
      %14 = sbr.rel (0) target = $region13
    $region12: #{patch_embedding.1} parent=1 // pred_region
      _
    $region13: #{patch_embedding.1} parent=1 // pred_fallthru
      _
    %v16 = vld [vmem:[%s0] sm:$0xff]
    %v17 = vld [vmem:[%s0 + $0x8] sm:$0xff]
    %v18 = vld [vmem:[%s0 + $0x10] sm:$0xff]
    %v19 = vld [vmem:[%s1] sm:$0xf]
    %v20 = vld [vmem:[%s1 + $0x4] sm:$0xf]
    %v21 = vld [vmem:[%s1 + $0x8] sm:$0xf]
    %v22 = vld [vmem:[%s1 + $0xc] sm:$0xf]
    %v23 = vld [vmem:[%s1 + $0x10] sm:$0xf]
    %v24 = vld [vmem:[%s1 + $0x14] sm:$0xf]
    %v25 = vld [vmem:[%s1 + $0x18] sm:$0xf]
    %v26 = vld [vmem:[%s1 + $0x1c] sm:$0xf]
    %v27 = vld [vmem:[%s1 + $0x20] sm:$0xf]
    %v28 = vld [vmem:[%s1 + $0x24] sm:$0xf]
    %v29 = vld [vmem:[%s1 + $0x28] sm:$0xf]
    %v30 = vld [vmem:[%s1 + $0x2c] sm:$0xf]
    %v31 = vld [vmem:[%s1 + $0x30] sm:$0xf]
    %v32 = vld [vmem:[%s1 + $0x34] sm:$0xf]
    %v33 = vld [vmem:[%s1 + $0x38] sm:$0xf]
    %v34 = vld [vmem:[%s1 + $0x3c] sm:$0xf]
    %v35 = vld [vmem:[%s1 + $0x40] sm:$0xf]
    %v36 = vld [vmem:[%s1 + $0x44] sm:$0xf]
    %v37 = vld [vmem:[%s1 + $0x48] sm:$0xf]
    %v38 = vld [vmem:[%s1 + $0x4c] sm:$0xf]
    %v39 = vld [vmem:[%s1 + $0x50] sm:$0xf]
    %v40 = vld [vmem:[%s1 + $0x54] sm:$0xf]
    %v41 = vld [vmem:[%s1 + $0x58] sm:$0xf]
    %v42 = vld [vmem:[%s1 + $0x5c] sm:$0xf]
    %v43 = vld [vmem:[%s1 + $0x60] sm:$0xf]
    %v44 = vld [vmem:[%s1 + $0x64] sm:$0xf]
    %v45 = vld [vmem:[%s1 + $0x68] sm:$0xf]
    %v46 = vld [vmem:[%s1 + $0x6c] sm:$0xf]
    %v47 = vld [vmem:[%s1 + $0x70] sm:$0xf]
    %v48 = vld [vmem:[%s1 + $0x74] sm:$0xf]
    %v49 = vld [vmem:[%s1 + $0x78] sm:$0xf]
    %v50 = vld [vmem:[%s1 + $0x7c] sm:$0xf]
    %v51 = vld [vmem:[%s1 + $0x80] sm:$0xf]
    %v52 = vld [vmem:[%s1 + $0x84] sm:$0xf]
    %v53 = vld [vmem:[%s1 + $0x88] sm:$0xf]
    %v54 = vld [vmem:[%s1 + $0x8c] sm:$0xf]
    %v55 = vld [vmem:[%s1 + $0x90] sm:$0xf]
    %v56 = vld [vmem:[%s1 + $0x94] sm:$0xf]
    %v57 = vld [vmem:[%s1 + $0x98] sm:$0xf]
    %v58 = vld [vmem:[%s1 + $0x9c] sm:$0xf]
    %v59 = vld [vmem:[%s1 + $0xa0] sm:$0xf]
    %v60 = vld [vmem:[%s1 + $0xa4] sm:$0xf]
    %v61 = vld [vmem:[%s1 + $0xa8] sm:$0xf]
    %v62 = vld [vmem:[%s1 + $0xac] sm:$0xf]
    %v63 = vld [vmem:[%s1 + $0xb0] sm:$0xf]
    %v64 = vld [vmem:[%s1 + $0xb4] sm:$0xf]
    %v65 = vld [vmem:[%s1 + $0xb8] sm:$0xf]
    %v66 = vld [vmem:[%s1 + $0xbc] sm:$0xf]
    %v67 = vld [vmem:[%s1 + $0xc0] sm:$0xf]
    %v68 = vld [vmem:[%s1 + $0xc4] sm:$0xf]
    %v69 = vld [vmem:[%s1 + $0xc8] sm:$0xf]
    %v70 = vld [vmem:[%s1 + $0xcc] sm:$0xf]
    %v71 = vld [vmem:[%s1 + $0xd0] sm:$0xf]
    %v72 = vld [vmem:[%s1 + $0xd4] sm:$0xf]
    %v73 = vld [vmem:[%s1 + $0xd8] sm:$0xf]
    %v74 = vld [vmem:[%s1 + $0xdc] sm:$0xf]
    %v75 = vld [vmem:[%s1 + $0xe0] sm:$0xf]
    %v76 = vld [vmem:[%s1 + $0xe4] sm:$0xf]
    %v77 = vld [vmem:[%s1 + $0xe8] sm:$0xf]
    %v78 = vld [vmem:[%s1 + $0xec] sm:$0xf]
    %v79 = vld [vmem:[%s1 + $0xf0] sm:$0xf]
    %v80 = vld [vmem:[%s1 + $0xf4] sm:$0xf]
    %v81 = vld [vmem:[%s1 + $0xf8] sm:$0xf]
    %v82 = vld [vmem:[%s1 + $0xfc] sm:$0xf]
    %v83 = vld [vmem:[%s1 + $0x100] sm:$0xf]
    %v84 = vld [vmem:[%s1 + $0x104] sm:$0xf]
    %v85 = vld [vmem:[%s1 + $0x108] sm:$0xf]
    %v86 = vld [vmem:[%s1 + $0x10c] sm:$0xf]
    %v87 = vld [vmem:[%s1 + $0x110] sm:$0xf]
    %v88 = vld [vmem:[%s1 + $0x114] sm:$0xf]
    %v89 = vld [vmem:[%s1 + $0x118] sm:$0xf]
    %v90 = vld [vmem:[%s1 + $0x11c] sm:$0xf]
    %v91 = vld [vmem:[%s1 + $0x120] sm:$0xf]
    %v92 = vld [vmem:[%s1 + $0x124] sm:$0xf]
    %v93 = vld [vmem:[%s1 + $0x128] sm:$0xf]
    %v94 = vld [vmem:[%s1 + $0x12c] sm:$0xf]
    %v95 = vld [vmem:[%s1 + $0x130] sm:$0xf]
    %v96 = vld [vmem:[%s1 + $0x134] sm:$0xf]
    %v97 = vld [vmem:[%s1 + $0x138] sm:$0xf]
    %v98 = vld [vmem:[%s1 + $0x13c] sm:$0xf]
    %v99 = vld [vmem:[%s1 + $0x140] sm:$0xf]
    %v100 = vld [vmem:[%s1 + $0x144] sm:$0xf]
    %v101 = vld [vmem:[%s1 + $0x148] sm:$0xf]
    %v102 = vld [vmem:[%s1 + $0x14c] sm:$0xf]
    %v103 = vld [vmem:[%s1 + $0x150] sm:$0xf]
    %v104 = vld [vmem:[%s1 + $0x154] sm:$0xf]
    %v105 = vld [vmem:[%s1 + $0x158] sm:$0xf]
    %v106 = vld [vmem:[%s1 + $0x15c] sm:$0xf]
    %v107 = vld [vmem:[%s1 + $0x160] sm:$0xf]
    %v108 = vld [vmem:[%s1 + $0x164] sm:$0xf]
    %v109 = vld [vmem:[%s1 + $0x168] sm:$0xf]
    %v110 = vld [vmem:[%s1 + $0x16c] sm:$0xf]
    %v111 = vld [vmem:[%s1 + $0x170] sm:$0xf]
    %v112 = vld [vmem:[%s1 + $0x174] sm:$0xf]
    %v113 = vld [vmem:[%s1 + $0x178] sm:$0xf]
    %v114 = vld [vmem:[%s1 + $0x17c] sm:$0xf]
    %v115 = vld [vmem:[%s2] sm:$0x1]
    %v117 = vlaneseq
    %v118 = vshrl.u32 %v117, 7
    %v119 = vsub.s32 0, %v118
    %v120 = vrot.slane %v115, %v119
    %v125 = vunpack.c.l.b16 %v16
    %v126 = vunpack.c.h.b16 %v16
    %v127 = vunpack.c.l.b16 %v17
    %v128 = vunpack.c.h.b16 %v17
    %v129 = vunpack.c.l.b16 %v18
    %v130 = vunpack.c.h.b16 %v18
    %v131 = vpack.c.b16 %v125, %v125
    %v132 = vpack.c.b16 %v126, %v126
    %v133 = vpack.c.b16 %v127, %v127
    %v134 = vpack.c.b16 %v128, %v128
    %v135 = vpack.c.b16 %v129, %v129
    %v136 = vpack.c.b16 %v130, %v130
    %v239 = vunpack.c.l.b16 %v19
    %v240 = vunpack.c.l.b16 %v20
    %v241 = vunpack.c.l.b16 %v21
    %v242 = vunpack.c.l.b16 %v22
    %v243 = vunpack.c.l.b16 %v23
    %v244 = vunpack.c.l.b16 %v24
    %v245 = vunpack.c.l.b16 %v25
    %v246 = vunpack.c.l.b16 %v26
    %v247 = vunpack.c.l.b16 %v27
    %v248 = vunpack.c.l.b16 %v28
    %v249 = vunpack.c.l.b16 %v29
    %v250 = vunpack.c.l.b16 %v30
    %v251 = vunpack.c.l.b16 %v31
    %v252 = vunpack.c.l.b16 %v32
    %v253 = vunpack.c.l.b16 %v33
    %v254 = vunpack.c.l.b16 %v34
    %v255 = vunpack.c.l.b16 %v35
    %v256 = vunpack.c.l.b16 %v36
    %v257 = vunpack.c.l.b16 %v37
    %v258 = vunpack.c.l.b16 %v38
    %v259 = vunpack.c.l.b16 %v39
    %v260 = vunpack.c.l.b16 %v40
    %v261 = vunpack.c.l.b16 %v41
    %v262 = vunpack.c.l.b16 %v42
    %v263 = vunpack.c.l.b16 %v43
    %v264 = vunpack.c.l.b16 %v44
    %v265 = vunpack.c.l.b16 %v45
    %v266 = vunpack.c.l.b16 %v46
    %v267 = vunpack.c.l.b16 %v47
    %v268 = vunpack.c.l.b16 %v48
    %v269 = vunpack.c.l.b16 %v49
    %v270 = vunpack.c.l.b16 %v50
    %v271 = vunpack.c.l.b16 %v51
    %v272 = vunpack.c.l.b16 %v52
    %v273 = vunpack.c.l.b16 %v53
    %v274 = vunpack.c.l.b16 %v54
    %v275 = vunpack.c.l.b16 %v55
    %v276 = vunpack.c.l.b16 %v56
    %v277 = vunpack.c.l.b16 %v57
    %v278 = vunpack.c.l.b16 %v58
    %v279 = vunpack.c.l.b16 %v59
    %v280 = vunpack.c.l.b16 %v60
    %v281 = vunpack.c.l.b16 %v61
    %v282 = vunpack.c.l.b16 %v62
    %v283 = vunpack.c.l.b16 %v63
    %v284 = vunpack.c.l.b16 %v64
    %v285 = vunpack.c.l.b16 %v65
    %v286 = vunpack.c.l.b16 %v66
    %v287 = vunpack.c.l.b16 %v67
    %v288 = vunpack.c.l.b16 %v68
    %v289 = vunpack.c.l.b16 %v69
    %v290 = vunpack.c.l.b16 %v70
    %v291 = vunpack.c.l.b16 %v71
    %v292 = vunpack.c.l.b16 %v72
    %v293 = vunpack.c.l.b16 %v73
    %v294 = vunpack.c.l.b16 %v74
    %v295 = vunpack.c.l.b16 %v75
    %v296 = vunpack.c.l.b16 %v76
    %v297 = vunpack.c.l.b16 %v77
    %v298 = vunpack.c.l.b16 %v78
    %v299 = vunpack.c.l.b16 %v79
    %v300 = vunpack.c.l.b16 %v80
    %v301 = vunpack.c.l.b16 %v81
    %v302 = vunpack.c.l.b16 %v82
    %v303 = vunpack.c.l.b16 %v83
    %v304 = vunpack.c.l.b16 %v84
    %v305 = vunpack.c.l.b16 %v85
    %v306 = vunpack.c.l.b16 %v86
    %v307 = vunpack.c.l.b16 %v87
    %v308 = vunpack.c.l.b16 %v88
    %v309 = vunpack.c.l.b16 %v89
    %v310 = vunpack.c.l.b16 %v90
    %v311 = vunpack.c.l.b16 %v91
    %v312 = vunpack.c.l.b16 %v92
    %v313 = vunpack.c.l.b16 %v93
    %v314 = vunpack.c.l.b16 %v94
    %v315 = vunpack.c.l.b16 %v95
    %v316 = vunpack.c.l.b16 %v96
    %v317 = vunpack.c.l.b16 %v97
    %v318 = vunpack.c.l.b16 %v98
    %v319 = vunpack.c.l.b16 %v99
    %v320 = vunpack.c.l.b16 %v100
    %v321 = vunpack.c.l.b16 %v101
    %v322 = vunpack.c.l.b16 %v102
    %v323 = vunpack.c.l.b16 %v103
    %v324 = vunpack.c.l.b16 %v104
    %v325 = vunpack.c.l.b16 %v105
    %v326 = vunpack.c.l.b16 %v106
    %v327 = vunpack.c.l.b16 %v107
    %v328 = vunpack.c.l.b16 %v108
    %v329 = vunpack.c.l.b16 %v109
    %v330 = vunpack.c.l.b16 %v110
    %v331 = vunpack.c.l.b16 %v111
    %v332 = vunpack.c.l.b16 %v112
    %v333 = vunpack.c.l.b16 %v113
    %v334 = vunpack.c.l.b16 %v114
    %v335 = vpack.c.b16 %v240, %v239
    %v336 = vpack.c.b16 %v242, %v241
    %v337 = vpack.c.b16 %v244, %v243
    %v338 = vpack.c.b16 %v246, %v245
    %v339 = vpack.c.b16 %v248, %v247
    %v340 = vpack.c.b16 %v250, %v249
    %v341 = vpack.c.b16 %v252, %v251
    %v342 = vpack.c.b16 %v254, %v253
    %v343 = vpack.c.b16 %v256, %v255
    %v344 = vpack.c.b16 %v258, %v257
    %v345 = vpack.c.b16 %v260, %v259
    %v346 = vpack.c.b16 %v262, %v261
    %v347 = vpack.c.b16 %v264, %v263
    %v348 = vpack.c.b16 %v266, %v265
    %v349 = vpack.c.b16 %v268, %v267
    %v350 = vpack.c.b16 %v270, %v269
    %v351 = vpack.c.b16 %v272, %v271
    %v352 = vpack.c.b16 %v274, %v273
    %v353 = vpack.c.b16 %v276, %v275
    %v354 = vpack.c.b16 %v278, %v277
    %v355 = vpack.c.b16 %v280, %v279
    %v356 = vpack.c.b16 %v282, %v281
    %v357 = vpack.c.b16 %v284, %v283
    %v358 = vpack.c.b16 %v286, %v285
    %v359 = vpack.c.b16 %v288, %v287
    %v360 = vpack.c.b16 %v290, %v289
    %v361 = vpack.c.b16 %v292, %v291
    %v362 = vpack.c.b16 %v294, %v293
    %v363 = vpack.c.b16 %v296, %v295
    %v364 = vpack.c.b16 %v298, %v297
    %v365 = vpack.c.b16 %v300, %v299
    %v366 = vpack.c.b16 %v302, %v301
    %v367 = vpack.c.b16 %v304, %v303
    %v368 = vpack.c.b16 %v306, %v305
    %v369 = vpack.c.b16 %v308, %v307
    %v370 = vpack.c.b16 %v310, %v309
    %v371 = vpack.c.b16 %v312, %v311
    %v372 = vpack.c.b16 %v314, %v313
    %v373 = vpack.c.b16 %v316, %v315
    %v374 = vpack.c.b16 %v318, %v317
    %v375 = vpack.c.b16 %v320, %v319
    %v376 = vpack.c.b16 %v322, %v321
    %v377 = vpack.c.b16 %v324, %v323
    %v378 = vpack.c.b16 %v326, %v325
    %v379 = vpack.c.b16 %v328, %v327
    %v380 = vpack.c.b16 %v330, %v329
    %v381 = vpack.c.b16 %v332, %v331
    %v382 = vpack.c.b16 %v334, %v333
    %431 = vmatprep.subr.bf16.mxu0 0
    %432 = vmatpush1.bf16.msra.mxu0 %v342
    %433 = vmatprep.subr.bf16.mxu0 0
    %434 = vmatpush1.bf16.msra.mxu0 %v341
    %435 = vmatprep.subr.bf16.mxu0 0
    %436 = vmatpush1.bf16.msra.mxu0 %v340
    %437 = vmatprep.subr.bf16.mxu0 0
    %438 = vmatpush1.bf16.msra.mxu0 %v339
    %439 = vmatprep.subr.bf16.mxu0 0
    %440 = vmatpush1.bf16.msra.mxu0 %v338
    %441 = vmatprep.subr.bf16.mxu0 0
    %442 = vmatpush1.bf16.msra.mxu0 %v337
    %443 = vmatprep.subr.bf16.mxu0 0
    %444 = vmatpush1.bf16.msra.mxu0 %v336
    %445 = vmatprep.subr.bf16.mxu0 0
    %446 = vmatpush1.bf16.msra.mxu0 %v335
    %447 = vmatprep.subr.bf16.mxu0 0
    %448 = vmatpush2.bf16.msra.mxu0 %v350
    %449 = vmatprep.subr.bf16.mxu0 0
    %450 = vmatpush2.bf16.msra.mxu0 %v349
    %451 = vmatprep.subr.bf16.mxu0 0
    %452 = vmatpush2.bf16.msra.mxu0 %v348
    %453 = vmatprep.subr.bf16.mxu0 0
    %454 = vmatpush2.bf16.msra.mxu0 %v347
    %455 = vmatprep.subr.bf16.mxu0 0
    %456 = vmatpush2.bf16.msra.mxu0 %v346
    %457 = vmatprep.subr.bf16.mxu0 0
    %458 = vmatpush2.bf16.msra.mxu0 %v345
    %459 = vmatprep.subr.bf16.mxu0 0
    %460 = vmatpush2.bf16.msra.mxu0 %v344
    %461 = vmatprep.subr.bf16.mxu0 0
    %462 = vmatpush2.bf16.msra.mxu0 %v343
    %463 = vmatprep.mubr.bf16.mxu0 %v132
    %464 = vmatmul.mubr.bf16.gmra.mxu0 %v131
    %v465 = vpop.f32.mrf.mxu0
    %v466 = vadd.f32 %v120, %v465
    %v467 = vpop.f32.mrf.mxu0
    %v468 = vpop.f32.mrf.mxu0
    %v469 = vpop.f32.mrf.mxu0
    %470 = vdwg.mxu0
    %471 = vmatprep.subr.bf16.mxu0 0
    %472 = vmatpush1.bf16.msra.mxu0 %v358
    %473 = vmatprep.subr.bf16.mxu0 0
    %474 = vmatpush1.bf16.msra.mxu0 %v357
    %475 = vmatprep.subr.bf16.mxu0 0
    %476 = vmatpush1.bf16.msra.mxu0 %v356
    %477 = vmatprep.subr.bf16.mxu0 0
    %478 = vmatpush1.bf16.msra.mxu0 %v355
    %479 = vmatprep.subr.bf16.mxu0 0
    %480 = vmatpush1.bf16.msra.mxu0 %v354
    %481 = vmatprep.subr.bf16.mxu0 0
    %482 = vmatpush1.bf16.msra.mxu0 %v353
    %483 = vmatprep.subr.bf16.mxu0 0
    %484 = vmatpush1.bf16.msra.mxu0 %v352
    %485 = vmatprep.subr.bf16.mxu0 0
    %486 = vmatpush1.bf16.msra.mxu0 %v351
    %487 = vmatprep.subr.bf16.mxu0 0
    %488 = vmatpush2.bf16.msra.mxu0 %v366
    %489 = vmatprep.subr.bf16.mxu0 0
    %490 = vmatpush2.bf16.msra.mxu0 %v365
    %491 = vmatprep.subr.bf16.mxu0 0
    %492 = vmatpush2.bf16.msra.mxu0 %v364
    %493 = vmatprep.subr.bf16.mxu0 0
    %494 = vmatpush2.bf16.msra.mxu0 %v363
    %495 = vmatprep.subr.bf16.mxu0 0
    %496 = vmatpush2.bf16.msra.mxu0 %v362
    %497 = vmatprep.subr.bf16.mxu0 0
    %498 = vmatpush2.bf16.msra.mxu0 %v361
    %499 = vmatprep.subr.bf16.mxu0 0
    %500 = vmatpush2.bf16.msra.mxu0 %v360
    %501 = vmatprep.subr.bf16.mxu0 0
    %502 = vmatpush2.bf16.msra.mxu0 %v359
    %503 = vmatprep.mubr.bf16.mxu0 %v134
    %504 = vmatmul.mubr.bf16.gmra.mxu0 %v133
    %v505 = vpop.f32.mrf.mxu0
    %v506 = vadd.f32 %v466, %v505
    %v507 = vpop.f32.mrf.mxu0
    %v508 = vpop.f32.mrf.mxu0
    %v509 = vpop.f32.mrf.mxu0
    %510 = vdwg.mxu0
    %511 = vmatprep.subr.bf16.mxu0 0
    %512 = vmatpush1.bf16.msra.mxu0 %v374
    %513 = vmatprep.subr.bf16.mxu0 0
    %514 = vmatpush1.bf16.msra.mxu0 %v373
    %515 = vmatprep.subr.bf16.mxu0 0
    %516 = vmatpush1.bf16.msra.mxu0 %v372
    %517 = vmatprep.subr.bf16.mxu0 0
    %518 = vmatpush1.bf16.msra.mxu0 %v371
    %519 = vmatprep.subr.bf16.mxu0 0
    %520 = vmatpush1.bf16.msra.mxu0 %v370
    %521 = vmatprep.subr.bf16.mxu0 0
    %522 = vmatpush1.bf16.msra.mxu0 %v369
    %523 = vmatprep.subr.bf16.mxu0 0
    %524 = vmatpush1.bf16.msra.mxu0 %v368
    %525 = vmatprep.subr.bf16.mxu0 0
    %526 = vmatpush1.bf16.msra.mxu0 %v367
    %527 = vmatprep.subr.bf16.mxu0 0
    %528 = vmatpush2.bf16.msra.mxu0 %v382
    %529 = vmatprep.subr.bf16.mxu0 0
    %530 = vmatpush2.bf16.msra.mxu0 %v381
    %531 = vmatprep.subr.bf16.mxu0 0
    %532 = vmatpush2.bf16.msra.mxu0 %v380
    %533 = vmatprep.subr.bf16.mxu0 0
    %534 = vmatpush2.bf16.msra.mxu0 %v379
    %535 = vmatprep.subr.bf16.mxu0 0
    %536 = vmatpush2.bf16.msra.mxu0 %v378
    %537 = vmatprep.subr.bf16.mxu0 0
    %538 = vmatpush2.bf16.msra.mxu0 %v377
    %539 = vmatprep.subr.bf16.mxu0 0
    %540 = vmatpush2.bf16.msra.mxu0 %v376
    %541 = vmatprep.subr.bf16.mxu0 0
    %542 = vmatpush2.bf16.msra.mxu0 %v375
    %543 = vmatprep.mubr.bf16.mxu0 %v136
    %544 = vmatmul.mubr.bf16.gmra.mxu0 %v135
    %v545 = vpop.f32.mrf.mxu0
    %v546 = vadd.f32 %v506, %v545
    %v547 = vpop.f32.mrf.mxu0
    %v548 = vpop.f32.mrf.mxu0
    %v549 = vpop.f32.mrf.mxu0
    %550 = vdwg.mxu0
    %551 = vst [vmem:[#allocation2] sm:$0xff] %v546
    // Predicated region
    $region14: #{patch_embedding.1} parent=1 // pred_check
      _
    $region15: #{patch_embedding.1} parent=1 // pred_check_branch
      %553 = sbr.rel (0) target = $region17
    $region16: #{patch_embedding.1} parent=1 // pred_region
      %s555 = ssub.s32 128, 128
      %556 = vsyncadd [#allocation3], %s555
      %s558 = sshll.u32 [#allocation2], 4
      %s559 = int_to_ptr.vmem [resolvable:$true] %s558
      %561 = dma.vmem_to_hbm [thread:$0]  %s559, 128, %s3, [#allocation3]
    $region17: #{patch_embedding.1} parent=1 // pred_fallthru
      _
    // Predicated region
    $region18: #{patch_embedding.1} parent=1 // pred_check
      _
    $region19: #{patch_embedding.1} parent=1 // pred_check_branch
      %563 = sbr.rel (0) target = $region21
    $region20: #{patch_embedding.1} parent=1 // pred_region
      %564 = dma.done [#allocation3], 128
    $region21: #{patch_embedding.1} parent=1 // pred_fallthru
      _
    %565 = vsyncpa [#allocation3], 1

// kernel: patch_embedding.1
$region0: #{patch_embedding.1}
  #allocation0 [shape = 'u32[]', space=smem, size = 0x4, offset = 0x4, fixed_abs, tag = 'smem constant byte address 0x4 - core index']
  #allocation1 [shape = 'u32[144,128]{1,0:T(1,128)}', space=vmem, size = 0x12000, scoped, tag = 'internal scratch']
  %s0 = inlined_call_operand.vmem [shape: bf16[8,768], index: 0, kind: input, shape index: {}]
  %s1 = inlined_call_operand.vmem [shape: bf16[768,128], index: 1, kind: input, shape index: {}]
  %s2 = inlined_call_operand.vmem [shape: f32[1,128], index: 2, kind: input, shape index: {}]
  %s3 = inlined_call_operand.hbm [shape: f32[8,128], index: 3, kind: output, shape index: {}]
  %s4 = sld [smem:[#allocation0]]
  $region22: #{patch_embedding.1} parent=0
    _
  %s6 = ssub.s32 1, %s4
  %s7 = scalar_select 0, %s6, %s4
  $region1: #{patch_embedding.1} parent=0
    #allocation2 [shape = 'u8[4096]{0}', space=vmem, size = 0x1000, scoped, tag = 'output window, operand 0, single buffered']
    #allocation3 [shape = 's32[1]{0}', space=sflag, size = 0x4, scoped, tag = 'scoped memory for patch_embedding.1']
    %8 = vsyncpa [#allocation3], 0
    // Predicated region
    $region2: #{patch_embedding.1} parent=1 // pred_check
      _
    $region3: #{patch_embedding.1} parent=1 // pred_check_branch
      %10 = sbr.rel (0) target = $region5
    $region4: #{patch_embedding.1} parent=1 // pred_region
      _
    $region5: #{patch_embedding.1} parent=1 // pred_fallthru
      _
    // Predicated region
    $region6: #{patch_embedding.1} parent=1 // pred_check
      _
    $region7: #{patch_embedding.1} parent=1 // pred_check_branch
      %12 = sbr.rel (0) target = $region9
    $region8: #{patch_embedding.1} parent=1 // pred_region
      _
    $region9: #{patch_embedding.1} parent=1 // pred_fallthru
      _
    // Predicated region
    $region10: #{patch_embedding.1} parent=1 // pred_check
      _
    $region11: #{patch_embedding.1} parent=1 // pred_check_branch
      %14 = sbr.rel (0) target = $region13
    $region12: #{patch_embedding.1} parent=1 // pred_region
      _
    $region13: #{patch_embedding.1} parent=1 // pred_fallthru
      _
    %v16 = vld [vmem:[%s0] sm:$0xff]
    %v17 = vld [vmem:[%s0 + $0x8] sm:$0xff]
    %v18 = vld [vmem:[%s0 + $0x10] sm:$0xff]
    %v19 = vld [vmem:[%s1] sm:$0xf]
    %v20 = vld [vmem:[%s1 + $0x4] sm:$0xf]
    %v21 = vld [vmem:[%s1 + $0x8] sm:$0xf]
    %v22 = vld [vmem:[%s1 + $0xc] sm:$0xf]
    %v23 = vld [vmem:[%s1 + $0x10] sm:$0xf]
    %v24 = vld [vmem:[%s1 + $0x14] sm:$0xf]
    %v25 = vld [vmem:[%s1 + $0x18] sm:$0xf]
    %v26 = vld [vmem:[%s1 + $0x1c] sm:$0xf]
    %v27 = vld [vmem:[%s1 + $0x20] sm:$0xf]
    %v28 = vld [vmem:[%s1 + $0x24] sm:$0xf]
    %v29 = vld [vmem:[%s1 + $0x28] sm:$0xf]
    %v30 = vld [vmem:[%s1 + $0x2c] sm:$0xf]
    %v31 = vld [vmem:[%s1 + $0x30] sm:$0xf]
    %v32 = vld [vmem:[%s1 + $0x34] sm:$0xf]
    %v33 = vld [vmem:[%s1 + $0x38] sm:$0xf]
    %v34 = vld [vmem:[%s1 + $0x3c] sm:$0xf]
    %v35 = vld [vmem:[%s1 + $0x40] sm:$0xf]
    %v36 = vld [vmem:[%s1 + $0x44] sm:$0xf]
    %v37 = vld [vmem:[%s1 + $0x48] sm:$0xf]
    %v38 = vld [vmem:[%s1 + $0x4c] sm:$0xf]
    %v39 = vld [vmem:[%s1 + $0x50] sm:$0xf]
    %v40 = vld [vmem:[%s1 + $0x54] sm:$0xf]
    %v41 = vld [vmem:[%s1 + $0x58] sm:$0xf]
    %v42 = vld [vmem:[%s1 + $0x5c] sm:$0xf]
    %v43 = vld [vmem:[%s1 + $0x60] sm:$0xf]
    %v44 = vld [vmem:[%s1 + $0x64] sm:$0xf]
    %v45 = vld [vmem:[%s1 + $0x68] sm:$0xf]
    %v46 = vld [vmem:[%s1 + $0x6c] sm:$0xf]
    %v47 = vld [vmem:[%s1 + $0x70] sm:$0xf]
    %v48 = vld [vmem:[%s1 + $0x74] sm:$0xf]
    %v49 = vld [vmem:[%s1 + $0x78] sm:$0xf]
    %v50 = vld [vmem:[%s1 + $0x7c] sm:$0xf]
    %v51 = vld [vmem:[%s1 + $0x80] sm:$0xf]
    %v52 = vld [vmem:[%s1 + $0x84] sm:$0xf]
    %v53 = vld [vmem:[%s1 + $0x88] sm:$0xf]
    %v54 = vld [vmem:[%s1 + $0x8c] sm:$0xf]
    %v55 = vld [vmem:[%s1 + $0x90] sm:$0xf]
    %v56 = vld [vmem:[%s1 + $0x94] sm:$0xf]
    %v57 = vld [vmem:[%s1 + $0x98] sm:$0xf]
    %v58 = vld [vmem:[%s1 + $0x9c] sm:$0xf]
    %v59 = vld [vmem:[%s1 + $0xa0] sm:$0xf]
    %v60 = vld [vmem:[%s1 + $0xa4] sm:$0xf]
    %v61 = vld [vmem:[%s1 + $0xa8] sm:$0xf]
    %v62 = vld [vmem:[%s1 + $0xac] sm:$0xf]
    %v63 = vld [vmem:[%s1 + $0xb0] sm:$0xf]
    %v64 = vld [vmem:[%s1 + $0xb4] sm:$0xf]
    %v65 = vld [vmem:[%s1 + $0xb8] sm:$0xf]
    %v66 = vld [vmem:[%s1 + $0xbc] sm:$0xf]
    %v67 = vld [vmem:[%s1 + $0xc0] sm:$0xf]
    %v68 = vld [vmem:[%s1 + $0xc4] sm:$0xf]
    %v69 = vld [vmem:[%s1 + $0xc8] sm:$0xf]
    %v70 = vld [vmem:[%s1 + $0xcc] sm:$0xf]
    %v71 = vld [vmem:[%s1 + $0xd0] sm:$0xf]
    %v72 = vld [vmem:[%s1 + $0xd4] sm:$0xf]
    %v73 = vld [vmem:[%s1 + $0xd8] sm:$0xf]
    %v74 = vld [vmem:[%s1 + $0xdc] sm:$0xf]
    %v75 = vld [vmem:[%s1 + $0xe0] sm:$0xf]
    %v76 = vld [vmem:[%s1 + $0xe4] sm:$0xf]
    %v77 = vld [vmem:[%s1 + $0xe8] sm:$0xf]
    %v78 = vld [vmem:[%s1 + $0xec] sm:$0xf]
    %v79 = vld [vmem:[%s1 + $0xf0] sm:$0xf]
    %v80 = vld [vmem:[%s1 + $0xf4] sm:$0xf]
    %v81 = vld [vmem:[%s1 + $0xf8] sm:$0xf]
    %v82 = vld [vmem:[%s1 + $0xfc] sm:$0xf]
    %v83 = vld [vmem:[%s1 + $0x100] sm:$0xf]
    %v84 = vld [vmem:[%s1 + $0x104] sm:$0xf]
    %v85 = vld [vmem:[%s1 + $0x108] sm:$0xf]
    %v86 = vld [vmem:[%s1 + $0x10c] sm:$0xf]
    %v87 = vld [vmem:[%s1 + $0x110] sm:$0xf]
    %v88 = vld [vmem:[%s1 + $0x114] sm:$0xf]
    %v89 = vld [vmem:[%s1 + $0x118] sm:$0xf]
    %v90 = vld [vmem:[%s1 + $0x11c] sm:$0xf]
    %v91 = vld [vmem:[%s1 + $0x120] sm:$0xf]
    %v92 = vld [vmem:[%s1 + $0x124] sm:$0xf]
    %v93 = vld [vmem:[%s1 + $0x128] sm:$0xf]
    %v94 = vld [vmem:[%s1 + $0x12c] sm:$0xf]
    %v95 = vld [vmem:[%s1 + $0x130] sm:$0xf]
    %v96 = vld [vmem:[%s1 + $0x134] sm:$0xf]
    %v97 = vld [vmem:[%s1 + $0x138] sm:$0xf]
    %v98 = vld [vmem:[%s1 + $0x13c] sm:$0xf]
    %v99 = vld [vmem:[%s1 + $0x140] sm:$0xf]
    %v100 = vld [vmem:[%s1 + $0x144] sm:$0xf]
    %v101 = vld [vmem:[%s1 + $0x148] sm:$0xf]
    %v102 = vld [vmem:[%s1 + $0x14c] sm:$0xf]
    %v103 = vld [vmem:[%s1 + $0x150] sm:$0xf]
    %v104 = vld [vmem:[%s1 + $0x154] sm:$0xf]
    %v105 = vld [vmem:[%s1 + $0x158] sm:$0xf]
    %v106 = vld [vmem:[%s1 + $0x15c] sm:$0xf]
    %v107 = vld [vmem:[%s1 + $0x160] sm:$0xf]
    %v108 = vld [vmem:[%s1 + $0x164] sm:$0xf]
    %v109 = vld [vmem:[%s1 + $0x168] sm:$0xf]
    %v110 = vld [vmem:[%s1 + $0x16c] sm:$0xf]
    %v111 = vld [vmem:[%s1 + $0x170] sm:$0xf]
    %v112 = vld [vmem:[%s1 + $0x174] sm:$0xf]
    %v113 = vld [vmem:[%s1 + $0x178] sm:$0xf]
    %v114 = vld [vmem:[%s1 + $0x17c] sm:$0xf]
    %v115 = vld [vmem:[%s2] sm:$0x1]
    %v117 = vlaneseq
    %v118 = vshrl.u32 %v117, 7
    %v119 = vsub.s32 0, %v118
    %v120 = vrot.slane %v115, %v119
    %v125 = vunpack.c.l.b16 %v16
    %v126 = vunpack.c.h.b16 %v16
    %v127 = vunpack.c.l.b16 %v17
    %v128 = vunpack.c.h.b16 %v17
    %v129 = vunpack.c.l.b16 %v18
    %v130 = vunpack.c.h.b16 %v18
    %v131 = vpack.c.b16 %v125, %v125
    %v132 = vpack.c.b16 %v126, %v126
    %v133 = vpack.c.b16 %v127, %v127
    %v134 = vpack.c.b16 %v128, %v128
    %v135 = vpack.c.b16 %v129, %v129
    %v136 = vpack.c.b16 %v130, %v130
    %v239 = vunpack.c.l.b16 %v19
    %v240 = vunpack.c.l.b16 %v20
    %v241 = vunpack.c.l.b16 %v21
    %v242 = vunpack.c.l.b16 %v22
    %v243 = vunpack.c.l.b16 %v23
    %v244 = vunpack.c.l.b16 %v24
    %v245 = vunpack.c.l.b16 %v25
    %v246 = vunpack.c.l.b16 %v26
    %v247 = vunpack.c.l.b16 %v27
    %v248 = vunpack.c.l.b16 %v28
    %v249 = vunpack.c.l.b16 %v29
    %v250 = vunpack.c.l.b16 %v30
    %v251 = vunpack.c.l.b16 %v31
    %v252 = vunpack.c.l.b16 %v32
    %v253 = vunpack.c.l.b16 %v33
    %v254 = vunpack.c.l.b16 %v34
    %v255 = vunpack.c.l.b16 %v35
    %v256 = vunpack.c.l.b16 %v36
    %v257 = vunpack.c.l.b16 %v37
    %v258 = vunpack.c.l.b16 %v38
    %v259 = vunpack.c.l.b16 %v39
    %v260 = vunpack.c.l.b16 %v40
    %v261 = vunpack.c.l.b16 %v41
    %v262 = vunpack.c.l.b16 %v42
    %v263 = vunpack.c.l.b16 %v43
    %v264 = vunpack.c.l.b16 %v44
    %v265 = vunpack.c.l.b16 %v45
    %v266 = vunpack.c.l.b16 %v46
    %v267 = vunpack.c.l.b16 %v47
    %v268 = vunpack.c.l.b16 %v48
    %v269 = vunpack.c.l.b16 %v49
    %v270 = vunpack.c.l.b16 %v50
    %v271 = vunpack.c.l.b16 %v51
    %v272 = vunpack.c.l.b16 %v52
    %v273 = vunpack.c.l.b16 %v53
    %v274 = vunpack.c.l.b16 %v54
    %v275 = vunpack.c.l.b16 %v55
    %v276 = vunpack.c.l.b16 %v56
    %v277 = vunpack.c.l.b16 %v57
    %v278 = vunpack.c.l.b16 %v58
    %v279 = vunpack.c.l.b16 %v59
    %v280 = vunpack.c.l.b16 %v60
    %v281 = vunpack.c.l.b16 %v61
    %v282 = vunpack.c.l.b16 %v62
    %v283 = vunpack.c.l.b16 %v63
    %v284 = vunpack.c.l.b16 %v64
    %v285 = vunpack.c.l.b16 %v65
    %v286 = vunpack.c.l.b16 %v66
    %v287 = vunpack.c.l.b16 %v67
    %v288 = vunpack.c.l.b16 %v68
    %v289 = vunpack.c.l.b16 %v69
    %v290 = vunpack.c.l.b16 %v70
    %v291 = vunpack.c.l.b16 %v71
    %v292 = vunpack.c.l.b16 %v72
    %v293 = vunpack.c.l.b16 %v73
    %v294 = vunpack.c.l.b16 %v74
    %v295 = vunpack.c.l.b16 %v75
    %v296 = vunpack.c.l.b16 %v76
    %v297 = vunpack.c.l.b16 %v77
    %v298 = vunpack.c.l.b16 %v78
    %v299 = vunpack.c.l.b16 %v79
    %v300 = vunpack.c.l.b16 %v80
    %v301 = vunpack.c.l.b16 %v81
    %v302 = vunpack.c.l.b16 %v82
    %v303 = vunpack.c.l.b16 %v83
    %v304 = vunpack.c.l.b16 %v84
    %v305 = vunpack.c.l.b16 %v85
    %v306 = vunpack.c.l.b16 %v86
    %v307 = vunpack.c.l.b16 %v87
    %v308 = vunpack.c.l.b16 %v88
    %v309 = vunpack.c.l.b16 %v89
    %v310 = vunpack.c.l.b16 %v90
    %v311 = vunpack.c.l.b16 %v91
    %v312 = vunpack.c.l.b16 %v92
    %v313 = vunpack.c.l.b16 %v93
    %v314 = vunpack.c.l.b16 %v94
    %v315 = vunpack.c.l.b16 %v95
    %v316 = vunpack.c.l.b16 %v96
    %v317 = vunpack.c.l.b16 %v97
    %v318 = vunpack.c.l.b16 %v98
    %v319 = vunpack.c.l.b16 %v99
    %v320 = vunpack.c.l.b16 %v100
    %v321 = vunpack.c.l.b16 %v101
    %v322 = vunpack.c.l.b16 %v102
    %v323 = vunpack.c.l.b16 %v103
    %v324 = vunpack.c.l.b16 %v104
    %v325 = vunpack.c.l.b16 %v105
    %v326 = vunpack.c.l.b16 %v106
    %v327 = vunpack.c.l.b16 %v107
    %v328 = vunpack.c.l.b16 %v108
    %v329 = vunpack.c.l.b16 %v109
    %v330 = vunpack.c.l.b16 %v110
    %v331 = vunpack.c.l.b16 %v111
    %v332 = vunpack.c.l.b16 %v112
    %v333 = vunpack.c.l.b16 %v113
    %v334 = vunpack.c.l.b16 %v114
    %v335 = vpack.c.b16 %v240, %v239
    %v336 = vpack.c.b16 %v242, %v241
    %v337 = vpack.c.b16 %v244, %v243
    %v338 = vpack.c.b16 %v246, %v245
    %v339 = vpack.c.b16 %v248, %v247
    %v340 = vpack.c.b16 %v250, %v249
    %v341 = vpack.c.b16 %v252, %v251
    %v342 = vpack.c.b16 %v254, %v253
    %v343 = vpack.c.b16 %v256, %v255
    %v344 = vpack.c.b16 %v258, %v257
    %v345 = vpack.c.b16 %v260, %v259
    %v346 = vpack.c.b16 %v262, %v261
    %v347 = vpack.c.b16 %v264, %v263
    %v348 = vpack.c.b16 %v266, %v265
    %v349 = vpack.c.b16 %v268, %v267
    %v350 = vpack.c.b16 %v270, %v269
    %v351 = vpack.c.b16 %v272, %v271
    %v352 = vpack.c.b16 %v274, %v273
    %v353 = vpack.c.b16 %v276, %v275
    %v354 = vpack.c.b16 %v278, %v277
    %v355 = vpack.c.b16 %v280, %v279
    %v356 = vpack.c.b16 %v282, %v281
    %v357 = vpack.c.b16 %v284, %v283
    %v358 = vpack.c.b16 %v286, %v285
    %v359 = vpack.c.b16 %v288, %v287
    %v360 = vpack.c.b16 %v290, %v289
    %v361 = vpack.c.b16 %v292, %v291
    %v362 = vpack.c.b16 %v294, %v293
    %v363 = vpack.c.b16 %v296, %v295
    %v364 = vpack.c.b16 %v298, %v297
    %v365 = vpack.c.b16 %v300, %v299
    %v366 = vpack.c.b16 %v302, %v301
    %v367 = vpack.c.b16 %v304, %v303
    %v368 = vpack.c.b16 %v306, %v305
    %v369 = vpack.c.b16 %v308, %v307
    %v370 = vpack.c.b16 %v310, %v309
    %v371 = vpack.c.b16 %v312, %v311
    %v372 = vpack.c.b16 %v314, %v313
    %v373 = vpack.c.b16 %v316, %v315
    %v374 = vpack.c.b16 %v318, %v317
    %v375 = vpack.c.b16 %v320, %v319
    %v376 = vpack.c.b16 %v322, %v321
    %v377 = vpack.c.b16 %v324, %v323
    %v378 = vpack.c.b16 %v326, %v325
    %v379 = vpack.c.b16 %v328, %v327
    %v380 = vpack.c.b16 %v330, %v329
    %v381 = vpack.c.b16 %v332, %v331
    %v382 = vpack.c.b16 %v334, %v333
    %431 = vmatprep.subr.bf16.mxu0 0
    %432 = vmatpush1.bf16.msra.mxu0 %v342
    %433 = vmatprep.subr.bf16.mxu0 0
    %434 = vmatpush1.bf16.msra.mxu0 %v341
    %435 = vmatprep.subr.bf16.mxu0 0
    %436 = vmatpush1.bf16.msra.mxu0 %v340
    %437 = vmatprep.subr.bf16.mxu0 0
    %438 = vmatpush1.bf16.msra.mxu0 %v339
    %439 = vmatprep.subr.bf16.mxu0 0
    %440 = vmatpush1.bf16.msra.mxu0 %v338
    %441 = vmatprep.subr.bf16.mxu0 0
    %442 = vmatpush1.bf16.msra.mxu0 %v337
    %443 = vmatprep.subr.bf16.mxu0 0
    %444 = vmatpush1.bf16.msra.mxu0 %v336
    %445 = vmatprep.subr.bf16.mxu0 0
    %446 = vmatpush1.bf16.msra.mxu0 %v335
    %447 = vmatprep.subr.bf16.mxu0 0
    %448 = vmatpush2.bf16.msra.mxu0 %v350
    %449 = vmatprep.subr.bf16.mxu0 0
    %450 = vmatpush2.bf16.msra.mxu0 %v349
    %451 = vmatprep.subr.bf16.mxu0 0
    %452 = vmatpush2.bf16.msra.mxu0 %v348
    %453 = vmatprep.subr.bf16.mxu0 0
    %454 = vmatpush2.bf16.msra.mxu0 %v347
    %455 = vmatprep.subr.bf16.mxu0 0
    %456 = vmatpush2.bf16.msra.mxu0 %v346
    %457 = vmatprep.subr.bf16.mxu0 0
    %458 = vmatpush2.bf16.msra.mxu0 %v345
    %459 = vmatprep.subr.bf16.mxu0 0
    %460 = vmatpush2.bf16.msra.mxu0 %v344
    %461 = vmatprep.subr.bf16.mxu0 0
    %462 = vmatpush2.bf16.msra.mxu0 %v343
    %463 = vmatprep.mubr.bf16.mxu0 %v132
    %464 = vmatmul.mubr.bf16.gmra.mxu0 %v131
    %v465 = vpop.f32.mrf.mxu0
    %v466 = vadd.f32 %v120, %v465
    %v467 = vpop.f32.mrf.mxu0
    %v468 = vpop.f32.mrf.mxu0
    %v469 = vpop.f32.mrf.mxu0
    %470 = vdwg.mxu0
    %471 = vmatprep.subr.bf16.mxu0 0
    %472 = vmatpush1.bf16.msra.mxu0 %v358
    %473 = vmatprep.subr.bf16.mxu0 0
    %474 = vmatpush1.bf16.msra.mxu0 %v357
    %475 = vmatprep.subr.bf16.mxu0 0
    %476 = vmatpush1.bf16.msra.mxu0 %v356
    %477 = vmatprep.subr.bf16.mxu0 0
    %478 = vmatpush1.bf16.msra.mxu0 %v355
    %479 = vmatprep.subr.bf16.mxu0 0
    %480 = vmatpush1.bf16.msra.mxu0 %v354
    %481 = vmatprep.subr.bf16.mxu0 0
    %482 = vmatpush1.bf16.msra.mxu0 %v353
    %483 = vmatprep.subr.bf16.mxu0 0
    %484 = vmatpush1.bf16.msra.mxu0 %v352
    %485 = vmatprep.subr.bf16.mxu0 0
    %486 = vmatpush1.bf16.msra.mxu0 %v351
    %487 = vmatprep.subr.bf16.mxu0 0
    %488 = vmatpush2.bf16.msra.mxu0 %v366
    %489 = vmatprep.subr.bf16.mxu0 0
    %490 = vmatpush2.bf16.msra.mxu0 %v365
    %491 = vmatprep.subr.bf16.mxu0 0
    %492 = vmatpush2.bf16.msra.mxu0 %v364
    %493 = vmatprep.subr.bf16.mxu0 0
    %494 = vmatpush2.bf16.msra.mxu0 %v363
    %495 = vmatprep.subr.bf16.mxu0 0
    %496 = vmatpush2.bf16.msra.mxu0 %v362
    %497 = vmatprep.subr.bf16.mxu0 0
    %498 = vmatpush2.bf16.msra.mxu0 %v361
    %499 = vmatprep.subr.bf16.mxu0 0
    %500 = vmatpush2.bf16.msra.mxu0 %v360
    %501 = vmatprep.subr.bf16.mxu0 0
    %502 = vmatpush2.bf16.msra.mxu0 %v359
    %503 = vmatprep.mubr.bf16.mxu0 %v134
    %504 = vmatmul.mubr.bf16.gmra.mxu0 %v133
    %v505 = vpop.f32.mrf.mxu0
    %v506 = vadd.f32 %v466, %v505
    %v507 = vpop.f32.mrf.mxu0
    %v508 = vpop.f32.mrf.mxu0
    %v509 = vpop.f32.mrf.mxu0
    %510 = vdwg.mxu0
    %511 = vmatprep.subr.bf16.mxu0 0
    %512 = vmatpush1.bf16.msra.mxu0 %v374
    %513 = vmatprep.subr.bf16.mxu0 0
    %514 = vmatpush1.bf16.msra.mxu0 %v373
    %515 = vmatprep.subr.bf16.mxu0 0
    %516 = vmatpush1.bf16.msra.mxu0 %v372
    %517 = vmatprep.subr.bf16.mxu0 0
    %518 = vmatpush1.bf16.msra.mxu0 %v371
    %519 = vmatprep.subr.bf16.mxu0 0
    %520 = vmatpush1.bf16.msra.mxu0 %v370
    %521 = vmatprep.subr.bf16.mxu0 0
    %522 = vmatpush1.bf16.msra.mxu0 %v369
    %523 = vmatprep.subr.bf16.mxu0 0
    %524 = vmatpush1.bf16.msra.mxu0 %v368
    %525 = vmatprep.subr.bf16.mxu0 0
    %526 = vmatpush1.bf16.msra.mxu0 %v367
    %527 = vmatprep.subr.bf16.mxu0 0
    %528 = vmatpush2.bf16.msra.mxu0 %v382
    %529 = vmatprep.subr.bf16.mxu0 0
    %530 = vmatpush2.bf16.msra.mxu0 %v381
    %531 = vmatprep.subr.bf16.mxu0 0
    %532 = vmatpush2.bf16.msra.mxu0 %v380
    %533 = vmatprep.subr.bf16.mxu0 0
    %534 = vmatpush2.bf16.msra.mxu0 %v379
    %535 = vmatprep.subr.bf16.mxu0 0
    %536 = vmatpush2.bf16.msra.mxu0 %v378
    %537 = vmatprep.subr.bf16.mxu0 0
    %538 = vmatpush2.bf16.msra.mxu0 %v377
    %539 = vmatprep.subr.bf16.mxu0 0
    %540 = vmatpush2.bf16.msra.mxu0 %v376
    %541 = vmatprep.subr.bf16.mxu0 0
    %542 = vmatpush2.bf16.msra.mxu0 %v375
    %543 = vmatprep.mubr.bf16.mxu0 %v136
    %544 = vmatmul.mubr.bf16.gmra.mxu0 %v135
    %v545 = vpop.f32.mrf.mxu0
    %v546 = vadd.f32 %v506, %v545
    %v547 = vpop.f32.mrf.mxu0
    %v548 = vpop.f32.mrf.mxu0
    %v549 = vpop.f32.mrf.mxu0
    %550 = vdwg.mxu0
    %551 = vst [vmem:[#allocation2] sm:$0xff] %v546
    // Predicated region
    $region14: #{patch_embedding.1} parent=1 // pred_check
      _
    $region15: #{patch_embedding.1} parent=1 // pred_check_branch
      %553 = sbr.rel (0) target = $region17
    $region16: #{patch_embedding.1} parent=1 // pred_region
      %s555 = ssub.s32 128, 128
      %556 = vsyncadd [#allocation3], %s555
      %s558 = sshll.u32 [#allocation2], 4
      %s559 = int_to_ptr.vmem [resolvable:$true] %s558
      %561 = dma.vmem_to_hbm [thread:$0]  %s559, 128, %s3, [#allocation3]
    $region17: #{patch_embedding.1} parent=1 // pred_fallthru
      _
    // Predicated region
    $region18: #{patch_embedding.1} parent=1 // pred_check
      _
    $region19: #{patch_embedding.1} parent=1 // pred_check_branch
      %563 = sbr.rel (0) target = $region21
    $region20: #{patch_embedding.1} parent=1 // pred_region
      %564 = dma.done [#allocation3], 128
    $region21: #{patch_embedding.1} parent=1 // pred_fallthru
      _
    %565 = vsyncpa [#allocation3], 1

</llo_original>
